<compile_context>
chip_gen: v7x
topology: tpu7x:2x2x1
jax: 0.10.0
libtpu: 0.0.40
codegen_flags: <defaults>
</compile_context>

<pallas_src>
import math
from functools import partial

import jax
import jax.numpy as jnp
import numpy as np
from jax.experimental import pallas as pl
from jax.experimental.pallas import tpu as pltpu


def _multi_att_kernel(x_ref, w1_ref, w2_ref, wpk_ref, out_ref, attn_ref,
                      *, T, BN, H, A, K, O):
    # x block for this batch tile: (T, BN, H)
    x3 = x_ref[...]
    x2 = x3.reshape(T * BN, H)                       # leading-dim merge only

    # ---- attention-score MLP: (T*BN, H) @ (H, A) -> ReLU -> @ (A, K) --------
    h1 = jnp.maximum(
        jnp.dot(x2, w1_ref[...], preferred_element_type=jnp.float32), 0.0)
    logits2 = jnp.dot(h1, w2_ref[...],
                      preferred_element_type=jnp.float32)     # (T*BN, K) f32
    logits3 = logits2.reshape(T, BN, K)              # leading-dim split

    # ---- softmax over the time axis (axis 0), matching F.softmax(attn, 0) ---
    m = jnp.max(logits3, axis=0, keepdims=True)      # (1, BN, K)
    e = jnp.exp(logits3 - m)                         # (T, BN, K)
    s = jnp.sum(e, axis=0, keepdims=True)            # (1, BN, K)
    attn3 = e * pl.reciprocal(s, approx=True)        # (T, BN, K), f32
    attn_ref[...] = attn3

    # ---- pool-then-project ---------------------------------------------------
    # pooled_k[n, h] = sum_t x[t, n, h] * attn[t, n, k]   (VPU multiply+reduce)
    parts = []
    for k in range(K):                               # K is tiny; static unroll
        wk = attn3[:, :, k:k + 1]                    # (T, BN, 1)
        parts.append(jnp.sum(x3 * wk, axis=0))       # (BN, H), f32
    # k-major lane concat -> (BN, K*H); matches the k-major reordered weight.
    pooled = jnp.concatenate(parts, axis=-1)
    # Single 128-deep MXU matmul: (BN, K*H) @ (K*H, O) -> (BN, O)
    out_ref[...] = jnp.dot(pooled, wpk_ref[...],
                           preferred_element_type=jnp.float32)


def _pick_block_n(N, max_bn=128):
    """Largest batch tile <= max_bn that divides N (prefer multiples of 8)."""
    if N <= max_bn:
        return N
    for bn in range(max_bn, 0, -1):
        if N % bn == 0 and bn % 8 == 0:
            return bn
    for bn in range(max_bn, 0, -1):
        if N % bn == 0:
            return bn
    return N


def multi_att_forward(x, w1, w2, wp_flat, *, block_n=None, cast_to_bf16=False):
    """Returns (out, attn) with the same semantics as MultiAtt.forward (3-D)."""
    T, N, H = x.shape
    A = w1.shape[1]
    K = w2.shape[1]
    O = wp_flat.shape[1]
    assert wp_flat.shape[0] == H * K

    # Reorder post_fc weight once (tiny (H*K, O) array): rows h*K+k -> k*H+h so
    # the kernel's k-major lane concatenation of pooled slabs contracts against
    # a single clean 2-D (K*H, O) block.
    wp_kmajor = wp_flat.reshape(H, K, O).transpose(1, 0, 2).reshape(K * H, O)

    if cast_to_bf16:
        # v6e / v7x: bf16 matmul operands; accumulation / softmax stay f32.
        x_in = x.astype(jnp.bfloat16)
        w1_in = w1.astype(jnp.bfloat16)
        w2_in = w2.astype(jnp.bfloat16)
        wp_in = wp_kmajor.astype(jnp.bfloat16)
    else:
        x_in, w1_in, w2_in, wp_in = x, w1, w2, wp_kmajor

    bn = block_n if block_n is not None else _pick_block_n(N)
    assert N % bn == 0, "batch tile must divide N"
    grid = (N // bn,)

    out, attn_tnk = pl.pallas_call(
        partial(_multi_att_kernel, T=T, BN=bn, H=H, A=A, K=K, O=O),
        out_shape=(
            jax.ShapeDtypeStruct((N, O), jnp.float32),
            jax.ShapeDtypeStruct((T, N, K), jnp.float32),
        ),
        grid_spec=pltpu.PrefetchScalarGridSpec(
            num_scalar_prefetch=0,
            grid=grid,
            in_specs=[
                pl.BlockSpec((T, bn, H), lambda i: (0, i, 0)),   # x tile over N
                pl.BlockSpec((H, A), lambda i: (0, 0)),          # w1 pinned
                pl.BlockSpec((A, K), lambda i: (0, 0)),          # w2 pinned
                pl.BlockSpec((K * H, O), lambda i: (0, 0)),      # post_fc pinned
            ],
            out_specs=[
                pl.BlockSpec((bn, O), lambda i: (i, 0)),
                pl.BlockSpec((T, bn, K), lambda i: (0, i, 0)),
            ],
        ),
        compiler_params=pltpu.CompilerParams(
            dimension_semantics=("parallel",),       # batch tiles independent
            vmem_limit_bytes=32 * 1024 * 1024,
        ),
    )(x_in, w1_in, w2_in, wp_in)

    # PyTorch returns attn already transposed to (N, T, K).
    attn = jnp.transpose(attn_tnk, (1, 0, 2))
    return out, attn


def _ref_forward(x, w1, w2, wp_flat):
    """Pure-JAX reference mirroring the PyTorch 3-D branch."""
    h1 = jnp.maximum(jnp.einsum('tnh,ha->tna', x, w1), 0.0)
    logits = jnp.einsum('tna,ak->tnk', h1, w2)
    attn = jax.nn.softmax(logits, axis=0)                  # softmax over time
    pooled = jnp.einsum('tnh,tnk->nhk', x, attn)           # bmm(x^T, attn)
    out = pooled.reshape(x.shape[1], -1) @ wp_flat         # post_fc (no bias)
    return out, jnp.transpose(attn, (1, 0, 2))


if __name__ == "__main__":
    # Small shapes consistent with the module: seq T=8, batch N=2,
    # input_size H=32, attention_dim A=16, attention_head_num K=4.
    T, N, H, A, K = 8, 2, 32, 16, 4

    key = jax.random.PRNGKey(0)
    k1, k2, k3, kx = jax.random.split(key, 4)
    w1 = jax.random.normal(k1, (H, A), jnp.float32) * (1.0 / math.sqrt(H))
    w2 = jax.random.normal(k2, (A, K), jnp.float32) * (1.0 / math.sqrt(A))
    wp_flat = jax.random.normal(k3, (H * K, H), jnp.float32) * (1.0 / math.sqrt(H * K))
    x = jax.random.normal(kx, (T, N, H), jnp.float32)

    out, attn = multi_att_forward(x, w1, w2, wp_flat)
    out, attn = jax.block_until_ready((out, attn))

    ref_out, ref_attn = _ref_forward(x, w1, w2, wp_flat)
    np.testing.assert_allclose(np.asarray(attn), np.asarray(ref_attn),
                               rtol=2e-2, atol=3e-3)
    np.testing.assert_allclose(np.asarray(out), np.asarray(ref_out),
                               rtol=2e-2, atol=2e-2)

    assert out.shape == (N, H) and attn.shape == (N, T, K)
    print("KERNEL_OK")
</pallas_src>

<mosaic_0001>
module attributes {stable_mosaic.version = 11 : i64} {
  func.func @_multi_att_kernel(%arg0: i32, %arg1: memref<8x2x32xf32, #tpu.memory_space<vmem>>, %arg2: memref<32x16xf32, #tpu.memory_space<vmem>>, %arg3: memref<16x4xf32, #tpu.memory_space<vmem>>, %arg4: memref<128x32xf32, #tpu.memory_space<vmem>>, %arg5: memref<2x32xf32, #tpu.memory_space<vmem>>, %arg6: memref<8x2x4xf32, #tpu.memory_space<vmem>>) attributes {dimension_semantics = [#tpu.dimension_semantics<parallel>], iteration_bounds = array<i64: 1>, scalar_prefetch = 0 : i64, scratch_operands = 0 : i64, tpu.core_type = #tpu.core_type<tc>, window_params = [{transform_indices = @transform_0, window_bounds = array<i64: 8, 2, 32>}, {pipeline_mode = #tpu.pipeline_mode<synchronous>, transform_indices = @transform_1, window_bounds = array<i64: 32, 16>}, {pipeline_mode = #tpu.pipeline_mode<synchronous>, transform_indices = @transform_2, window_bounds = array<i64: 16, 4>}, {pipeline_mode = #tpu.pipeline_mode<synchronous>, transform_indices = @transform_3, window_bounds = array<i64: 128, 32>}, {transform_indices = @transform_4, window_bounds = array<i64: 2, 32>}, {transform_indices = @transform_5, window_bounds = array<i64: 8, 2, 4>}]} {
    %c0 = arith.constant 0 : index
    %c0_0 = arith.constant 0 : index
    %c0_1 = arith.constant 0 : index
    %0 = vector.load %arg1[%c0, %c0_0, %c0_1] : memref<8x2x32xf32, #tpu.memory_space<vmem>>, vector<8x2x32xf32>
    %1 = vector.shape_cast %0 : vector<8x2x32xf32> to vector<16x32xf32>
    %c0_2 = arith.constant 0 : index
    %c0_3 = arith.constant 0 : index
    %2 = vector.load %arg2[%c0_2, %c0_3] : memref<32x16xf32, #tpu.memory_space<vmem>>, vector<32x16xf32>
    %cst = arith.constant dense<0.000000e+00> : vector<16x16xf32>
    %3 = tpu.matmul %1, %2, %cst {dimension_numbers = #tpu.dot_dimension_numbers<[1], [0], [0], [1], [0, 0, 1, 1], [], []>} : vector<16x32xf32>, vector<32x16xf32>, vector<16x16xf32> -> vector<16x16xf32>
    %cst_4 = arith.constant 0.000000e+00 : f32
    %4 = vector.broadcast %cst_4 : f32 to vector<16x16xf32>
    %5 = arith.maximumf %3, %4 : vector<16x16xf32>
    %c0_5 = arith.constant 0 : index
    %c0_6 = arith.constant 0 : index
    %6 = vector.load %arg3[%c0_5, %c0_6] : memref<16x4xf32, #tpu.memory_space<vmem>>, vector<16x4xf32>
    %cst_7 = arith.constant dense<0.000000e+00> : vector<16x4xf32>
    %7 = tpu.matmul %5, %6, %cst_7 {dimension_numbers = #tpu.dot_dimension_numbers<[1], [0], [0], [1], [0, 0, 1, 1], [], []>} : vector<16x16xf32>, vector<16x4xf32>, vector<16x4xf32> -> vector<16x4xf32>
    %8 = vector.shape_cast %7 : vector<16x4xf32> to vector<8x2x4xf32>
    %cst_8 = arith.constant dense<0xFF800000> : vector<2x4xf32>
    %9 = vector.multi_reduction <maximumf>, %8, %cst_8 [0] : vector<8x2x4xf32> to vector<2x4xf32>
    %10 = vector.shape_cast %9 : vector<2x4xf32> to vector<1x2x4xf32>
    %11 = vector.broadcast %10 : vector<1x2x4xf32> to vector<8x2x4xf32>
    %12 = arith.subf %8, %11 : vector<8x2x4xf32>
    %13 = math.exp %12 : vector<8x2x4xf32>
    %cst_9 = arith.constant dense<0.000000e+00> : vector<2x4xf32>
    %14 = vector.multi_reduction <add>, %13, %cst_9 [0] : vector<8x2x4xf32> to vector<2x4xf32>
    %15 = vector.shape_cast %14 : vector<2x4xf32> to vector<1x2x4xf32>
    %16 = tpu.reciprocal %15 {approx = true} : vector<1x2x4xf32> -> vector<1x2x4xf32>
    %17 = vector.broadcast %16 : vector<1x2x4xf32> to vector<8x2x4xf32>
    %18 = arith.mulf %13, %17 : vector<8x2x4xf32>
    %c0_10 = arith.constant 0 : index
    %c0_11 = arith.constant 0 : index
    %c0_12 = arith.constant 0 : index
    %19 = vector.load %arg6[%c0_10, %c0_11, %c0_12] : memref<8x2x4xf32, #tpu.memory_space<vmem>>, vector<8x2x4xf32>
    tpu.vector_store %arg6[%c0_10, %c0_11, %c0_12], %18 {strides = array<i32>} : memref<8x2x4xf32, #tpu.memory_space<vmem>>, vector<8x2x4xf32>,
    %20 = vector.extract_strided_slice %18 {offsets = [0, 0, 0], sizes = [8, 2, 1], strides = [1, 1, 1]} : vector<8x2x4xf32> to vector<8x2x1xf32>
    %21 = vector.broadcast %20 : vector<8x2x1xf32> to vector<8x2x32xf32>
    %22 = arith.mulf %0, %21 : vector<8x2x32xf32>
    %cst_13 = arith.constant dense<0.000000e+00> : vector<2x32xf32>
    %23 = vector.multi_reduction <add>, %22, %cst_13 [0] : vector<8x2x32xf32> to vector<2x32xf32>
    %24 = vector.extract_strided_slice %18 {offsets = [0, 0, 1], sizes = [8, 2, 1], strides = [1, 1, 1]} : vector<8x2x4xf32> to vector<8x2x1xf32>
    %25 = vector.broadcast %24 : vector<8x2x1xf32> to vector<8x2x32xf32>
    %26 = arith.mulf %0, %25 : vector<8x2x32xf32>
    %cst_14 = arith.constant dense<0.000000e+00> : vector<2x32xf32>
    %27 = vector.multi_reduction <add>, %26, %cst_14 [0] : vector<8x2x32xf32> to vector<2x32xf32>
    %28 = vector.extract_strided_slice %18 {offsets = [0, 0, 2], sizes = [8, 2, 1], strides = [1, 1, 1]} : vector<8x2x4xf32> to vector<8x2x1xf32>
    %29 = vector.broadcast %28 : vector<8x2x1xf32> to vector<8x2x32xf32>
    %30 = arith.mulf %0, %29 : vector<8x2x32xf32>
    %cst_15 = arith.constant dense<0.000000e+00> : vector<2x32xf32>
    %31 = vector.multi_reduction <add>, %30, %cst_15 [0] : vector<8x2x32xf32> to vector<2x32xf32>
    %32 = vector.extract_strided_slice %18 {offsets = [0, 0, 3], sizes = [8, 2, 1], strides = [1, 1, 1]} : vector<8x2x4xf32> to vector<8x2x1xf32>
    %33 = vector.broadcast %32 : vector<8x2x1xf32> to vector<8x2x32xf32>
    %34 = arith.mulf %0, %33 : vector<8x2x32xf32>
    %cst_16 = arith.constant dense<0.000000e+00> : vector<2x32xf32>
    %35 = vector.multi_reduction <add>, %34, %cst_16 [0] : vector<8x2x32xf32> to vector<2x32xf32>
    %36 = tpu.concatenate %23, %27, %31, %35 in 1 : vector<2x32xf32>, vector<2x32xf32>, vector<2x32xf32>, vector<2x32xf32> -> vector<2x128xf32>
    %c0_17 = arith.constant 0 : index
    %c0_18 = arith.constant 0 : index
    %37 = vector.load %arg4[%c0_17, %c0_18] : memref<128x32xf32, #tpu.memory_space<vmem>>, vector<128x32xf32>
    %cst_19 = arith.constant dense<0.000000e+00> : vector<2x32xf32>
    %38 = tpu.matmul %36, %37, %cst_19 {dimension_numbers = #tpu.dot_dimension_numbers<[1], [0], [0], [1], [0, 0, 1, 1], [], []>} : vector<2x128xf32>, vector<128x32xf32>, vector<2x32xf32> -> vector<2x32xf32>
    %c0_20 = arith.constant 0 : index
    %c0_21 = arith.constant 0 : index
    %39 = vector.load %arg5[%c0_20, %c0_21] : memref<2x32xf32, #tpu.memory_space<vmem>>, vector<2x32xf32>
    tpu.vector_store %arg5[%c0_20, %c0_21], %38 {strides = array<i32>} : memref<2x32xf32, #tpu.memory_space<vmem>>, vector<2x32xf32>,
    return
  }
  func.func @transform_0(%arg0: i32) -> (i32, i32, i32) {
    %c0_i32 = arith.constant 0 : i32
    %c0_i32_0 = arith.constant 0 : i32
    %c0_i32_1 = arith.constant 0 : i32
    return %c0_i32, %arg0, %c0_i32_0 : i32, i32, i32
  }
  func.func @transform_1(%arg0: i32) -> (i32, i32) {
    %c0_i32 = arith.constant 0 : i32
    %c0_i32_0 = arith.constant 0 : i32
    %c0_i32_1 = arith.constant 0 : i32
    return %c0_i32, %c0_i32_0 : i32, i32
  }
  func.func @transform_2(%arg0: i32) -> (i32, i32) {
    %c0_i32 = arith.constant 0 : i32
    %c0_i32_0 = arith.constant 0 : i32
    %c0_i32_1 = arith.constant 0 : i32
    return %c0_i32, %c0_i32_0 : i32, i32
  }
  func.func @transform_3(%arg0: i32) -> (i32, i32) {
    %c0_i32 = arith.constant 0 : i32
    %c0_i32_0 = arith.constant 0 : i32
    %c0_i32_1 = arith.constant 0 : i32
    return %c0_i32, %c0_i32_0 : i32, i32
  }
  func.func @transform_4(%arg0: i32) -> (i32, i32) {
    %c0_i32 = arith.constant 0 : i32
    %c0_i32_0 = arith.constant 0 : i32
    return %arg0, %c0_i32 : i32, i32
  }
  func.func @transform_5(%arg0: i32) -> (i32, i32, i32) {
    %c0_i32 = arith.constant 0 : i32
    %c0_i32_0 = arith.constant 0 : i32
    %c0_i32_1 = arith.constant 0 : i32
    return %c0_i32, %arg0, %c0_i32_0 : i32, i32, i32
  }
}

</mosaic_0001>

<llo_original>
// kernel: tpu_custom_call.1
$region0: #{tpu_custom_call.1}
  #allocation0 [shape = 'u32[]', space=smem, size = 0x4, offset = 0x4, fixed_abs, tag = 'smem constant byte address 0x4 - core index']
  #allocation1 [shape = 'u32[144,128]{1,0:T(1,128)}', space=vmem, size = 0x12000, scoped, tag = 'internal scratch']
  %s0 = inlined_call_operand.vmem [shape: f32[8,2,32], index: 0, kind: input, shape index: {}]
  %s1 = inlined_call_operand.vmem [shape: f32[32,16], index: 1, kind: input, shape index: {}]
  %s2 = inlined_call_operand.vmem [shape: f32[16,4], index: 2, kind: input, shape index: {}]
  %s3 = inlined_call_operand.vmem [shape: f32[128,32], index: 3, kind: input, shape index: {}]
  %s4 = inlined_call_operand.hbm [shape: f32[2,32], index: 4, kind: output, shape index: {0}]
  %s5 = inlined_call_operand.vmem [shape: f32[8,2,4], index: 5, kind: output, shape index: {1}]
  %6 = xla_tuple %s4, %s5
  %s7 = sld [smem:[#allocation0]]
  $region34: #{tpu_custom_call.1} parent=0
    _
  %s9 = ssub.s32 1, %s7
  %s10 = scalar_select 0, %s9, %s7
  $region1: #{tpu_custom_call.1} parent=0
    #allocation2 [shape = 'u8[1024]{0}', space=vmem, size = 0x400, scoped, tag = 'output window, operand 0, single buffered']
    #allocation3 [shape = 's32[1]{0}', space=sflag, size = 0x4, scoped, tag = 'scoped memory for tpu_custom_call.1']
    %11 = vsyncpa [#allocation3], 0
    // Predicated region
    $region2: #{tpu_custom_call.1} parent=1 // pred_check
      _
    $region3: #{tpu_custom_call.1} parent=1 // pred_check_branch
      %13 = sbr.rel (0) target = $region5
    $region4: #{tpu_custom_call.1} parent=1 // pred_region
      _
    $region5: #{tpu_custom_call.1} parent=1 // pred_fallthru
      _
    // Predicated region
    $region6: #{tpu_custom_call.1} parent=1 // pred_check
      _
    $region7: #{tpu_custom_call.1} parent=1 // pred_check_branch
      %15 = sbr.rel (0) target = $region9
    $region8: #{tpu_custom_call.1} parent=1 // pred_region
      _
    $region9: #{tpu_custom_call.1} parent=1 // pred_fallthru
      _
    // Predicated region
    $region10: #{tpu_custom_call.1} parent=1 // pred_check
      _
    $region11: #{tpu_custom_call.1} parent=1 // pred_check_branch
      %17 = sbr.rel (0) target = $region13
    $region12: #{tpu_custom_call.1} parent=1 // pred_region
      _
    $region13: #{tpu_custom_call.1} parent=1 // pred_fallthru
      _
    // Predicated region
    $region14: #{tpu_custom_call.1} parent=1 // pred_check
      _
    $region15: #{tpu_custom_call.1} parent=1 // pred_check_branch
      %19 = sbr.rel (0) target = $region17
    $region16: #{tpu_custom_call.1} parent=1 // pred_region
      _
    $region17: #{tpu_custom_call.1} parent=1 // pred_fallthru
      _
    %v20 = vld [vmem:[%s0] sm:$0x3]
    %v21 = vld [vmem:[%s0 + $0x2] sm:$0x3]
    %v22 = vld [vmem:[%s0 + $0x4] sm:$0x3]
    %v23 = vld [vmem:[%s0 + $0x6] sm:$0x3]
    %v24 = vld [vmem:[%s0 + $0x8] sm:$0x3]
    %v25 = vld [vmem:[%s0 + $0xa] sm:$0x3]
    %v26 = vld [vmem:[%s0 + $0xc] sm:$0x3]
    %v27 = vld [vmem:[%s0 + $0xe] sm:$0x3]
    %v28 = vld [vmem:[%s1] sm:$0xff]
    %v29 = vld [vmem:[%s1 + $0x8] sm:$0xff]
    %v30 = vld [vmem:[%s1 + $0x10] sm:$0xff]
    %v31 = vld [vmem:[%s1 + $0x18] sm:$0xff]
    %v40 = vcombine.low %v20, %v21
    %v41 = vcombine.low %v22, %v23
    %v43 = vunpack.c.l.s4 1983009808
    %v44 = vunpack.c.0.s8 %v43
    %v45 = vlaneseq
    %v46 = vshrl.u32 %v45, 7
    %v47 = vsub.s32 %v44, %v46
    %v48 = vrot.slane %v40, %v47
    %v50 = vunpack.c.l.s4 1983009808
    %v51 = vunpack.c.0.s8 %v50
    %v52 = vlaneseq
    %v53 = vshrl.u32 %v52, 7
    %v54 = vsub.s32 %v51, %v53
    %v55 = vrot.slane %v41, %v54
    %v56 = vcombine.low %v48, %v55
    %v57 = vcombine.low %v24, %v25
    %v58 = vcombine.low %v26, %v27
    %v60 = vunpack.c.l.s4 1983009808
    %v61 = vunpack.c.0.s8 %v60
    %v62 = vlaneseq
    %v63 = vshrl.u32 %v62, 7
    %v64 = vsub.s32 %v61, %v63
    %v65 = vrot.slane %v57, %v64
    %v67 = vunpack.c.l.s4 1983009808
    %v68 = vunpack.c.0.s8 %v67
    %v69 = vlaneseq
    %v70 = vshrl.u32 %v69, 7
    %v71 = vsub.s32 %v68, %v70
    %v72 = vrot.slane %v58, %v71
    %v73 = vcombine.low %v65, %v72
    %vm74 = vcmask 261120
    %v75 = vsel %vm74, %v56, 0
    %v77 = vsel %vm74, %v73, 0
    %79 = vmatprep.subr.mxu0 0.0
    %80 = vmatpush1.msra.mxu0 %v28
    %81 = vmatprep.subr.mxu0 0.0
    %82 = vmatpush1.msra.mxu0 %v29
    %83 = vmatprep.subr.mxu0 0.0
    %84 = vmatpush1.msra.mxu0 %v30
    %85 = vmatprep.subr.mxu0 0.0
    %86 = vmatpush1.msra.mxu0 %v31
    %87 = vmatprep.subr.mxu0 0.0
    %88 = vmatpush1.msra.mxu0 0.0
    %89 = vmatprep.subr.mxu0 0.0
    %90 = vmatpush1.msra.mxu0 0.0
    %91 = vmatprep.subr.mxu0 0.0
    %92 = vmatpush1.msra.mxu0 0.0
    %93 = vmatprep.subr.mxu0 0.0
    %94 = vmatpush1.msra.mxu0 0.0
    %95 = vmatprep.subr.mxu0 0.0
    %96 = vmatpush1.msra.mxu0 0.0
    %97 = vmatprep.subr.mxu0 0.0
    %98 = vmatpush1.msra.mxu0 0.0
    %99 = vmatprep.subr.mxu0 0.0
    %100 = vmatpush1.msra.mxu0 0.0
    %101 = vmatprep.subr.mxu0 0.0
    %102 = vmatpush1.msra.mxu0 0.0
    %103 = vmatprep.subr.mxu0 0.0
    %104 = vmatpush1.msra.mxu0 0.0
    %105 = vmatprep.subr.mxu0 0.0
    %106 = vmatpush1.msra.mxu0 0.0
    %107 = vmatprep.subr.mxu0 0.0
    %108 = vmatpush1.msra.mxu0 0.0
    %109 = vmatprep.subr.mxu0 0.0
    %110 = vmatpush1.msra.mxu0 0.0
    %111 = vmatprep.subr.mxu0 0.0
    %112 = vmatpush1.msra.mxu0 0.0
    %113 = vmatprep.subr.mxu0 0.0
    %114 = vmatpush1.msra.mxu0 0.0
    %115 = vmatprep.subr.mxu0 0.0
    %116 = vmatpush1.msra.mxu0 0.0
    %117 = vmatprep.subr.mxu0 0.0
    %118 = vmatpush1.msra.mxu0 0.0
    %119 = vmatprep.subr.mxu0 0.0
    %120 = vmatpush1.msra.mxu0 0.0
    %121 = vmatprep.subr.mxu0 0.0
    %122 = vmatpush1.msra.mxu0 0.0
    %123 = vmatprep.subr.mxu0 0.0
    %124 = vmatpush1.msra.mxu0 0.0
    %125 = vmatprep.subr.mxu0 0.0
    %126 = vmatpush1.msra.mxu0 0.0
    %127 = vmatprep.subr.mxu0 0.0
    %128 = vmatpush1.msra.mxu0 0.0
    %129 = vmatprep.subr.mxu0 0.0
    %130 = vmatpush1.msra.mxu0 0.0
    %131 = vmatprep.subr.mxu0 0.0
    %132 = vmatpush1.msra.mxu0 0.0
    %133 = vmatprep.subr.mxu0 0.0
    %134 = vmatpush1.msra.mxu0 0.0
    %135 = vmatprep.subr.mxu0 0.0
    %136 = vmatpush1.msra.mxu0 0.0
    %137 = vmatprep.subr.mxu0 0.0
    %138 = vmatpush1.msra.mxu0 0.0
    %139 = vmatprep.subr.mxu0 0.0
    %140 = vmatpush1.msra.mxu0 0.0
    %141 = vmatprep.subr.mxu0 0.0
    %142 = vmatpush1.msra.mxu0 0.0
    %143 = vmatprep.mubr.f32.mxu0 0.0
    %144 = vmatmul.mubr.f32.gmra.mrb[0].mxu0 %v75
    %v145 = vpop.f32.mrb[0].mxu0
    %v146 = vadd.f32 0.0, %v145
    %v147 = vpop.f32.mrb[0].mxu0
    %148 = vmatprep.mubr.f32.mxu0 0.0
    %149 = vmatmul.mubr.f32.gmra.mrb[0].mxu0 %v77
    %v150 = vpop.f32.mrb[0].mxu0
    %v151 = vadd.f32 0.0, %v150
    %v152 = vpop.f32.mrb[0].mxu0
    %153 = vdwg.mxu0
    %v154 = vmax.f32 %v146, 0.0
    %v155 = vmax.f32 %v151, 0.0
    %v156 = vld [vmem:[%s2] sm:$0xff]
    %v157 = vld [vmem:[%s2 + $0x8] sm:$0xff]
    %vm158 = vcmask 130048
    %v160 = vsel %vm158, %v154, 0
    %v163 = vsel %vm158, %v155, 0
    %165 = vmatprep.subr.mxu0 0.0
    %166 = vmatpush1.msra.mxu0 %v156
    %167 = vmatprep.subr.mxu0 0.0
    %168 = vmatpush1.msra.mxu0 %v157
    %169 = vmatprep.subr.mxu0 0.0
    %170 = vmatpush1.msra.mxu0 0.0
    %171 = vmatprep.subr.mxu0 0.0
    %172 = vmatpush1.msra.mxu0 0.0
    %173 = vmatprep.subr.mxu0 0.0
    %174 = vmatpush1.msra.mxu0 0.0
    %175 = vmatprep.subr.mxu0 0.0
    %176 = vmatpush1.msra.mxu0 0.0
    %177 = vmatprep.subr.mxu0 0.0
    %178 = vmatpush1.msra.mxu0 0.0
    %179 = vmatprep.subr.mxu0 0.0
    %180 = vmatpush1.msra.mxu0 0.0
    %181 = vmatprep.subr.mxu0 0.0
    %182 = vmatpush1.msra.mxu0 0.0
    %183 = vmatprep.subr.mxu0 0.0
    %184 = vmatpush1.msra.mxu0 0.0
    %185 = vmatprep.subr.mxu0 0.0
    %186 = vmatpush1.msra.mxu0 0.0
    %187 = vmatprep.subr.mxu0 0.0
    %188 = vmatpush1.msra.mxu0 0.0
    %189 = vmatprep.subr.mxu0 0.0
    %190 = vmatpush1.msra.mxu0 0.0
    %191 = vmatprep.subr.mxu0 0.0
    %192 = vmatpush1.msra.mxu0 0.0
    %193 = vmatprep.subr.mxu0 0.0
    %194 = vmatpush1.msra.mxu0 0.0
    %195 = vmatprep.subr.mxu0 0.0
    %196 = vmatpush1.msra.mxu0 0.0
    %197 = vmatprep.subr.mxu0 0.0
    %198 = vmatpush1.msra.mxu0 0.0
    %199 = vmatprep.subr.mxu0 0.0
    %200 = vmatpush1.msra.mxu0 0.0
    %201 = vmatprep.subr.mxu0 0.0
    %202 = vmatpush1.msra.mxu0 0.0
    %203 = vmatprep.subr.mxu0 0.0
    %204 = vmatpush1.msra.mxu0 0.0
    %205 = vmatprep.subr.mxu0 0.0
    %206 = vmatpush1.msra.mxu0 0.0
    %207 = vmatprep.subr.mxu0 0.0
    %208 = vmatpush1.msra.mxu0 0.0
    %209 = vmatprep.subr.mxu0 0.0
    %210 = vmatpush1.msra.mxu0 0.0
    %211 = vmatprep.subr.mxu0 0.0
    %212 = vmatpush1.msra.mxu0 0.0
    %213 = vmatprep.subr.mxu0 0.0
    %214 = vmatpush1.msra.mxu0 0.0
    %215 = vmatprep.subr.mxu0 0.0
    %216 = vmatpush1.msra.mxu0 0.0
    %217 = vmatprep.subr.mxu0 0.0
    %218 = vmatpush1.msra.mxu0 0.0
    %219 = vmatprep.subr.mxu0 0.0
    %220 = vmatpush1.msra.mxu0 0.0
    %221 = vmatprep.subr.mxu0 0.0
    %222 = vmatpush1.msra.mxu0 0.0
    %223 = vmatprep.subr.mxu0 0.0
    %224 = vmatpush1.msra.mxu0 0.0
    %225 = vmatprep.subr.mxu0 0.0
    %226 = vmatpush1.msra.mxu0 0.0
    %227 = vmatprep.subr.mxu0 0.0
    %228 = vmatpush1.msra.mxu0 0.0
    %229 = vmatprep.mubr.f32.mxu0 0.0
    %230 = vmatmul.mubr.f32.gmra.mrb[0].mxu0 %v160
    %v231 = vpop.f32.mrb[0].mxu0
    %v232 = vadd.f32 0.0, %v231
    %v233 = vpop.f32.mrb[0].mxu0
    %234 = vmatprep.mubr.f32.mxu0 0.0
    %235 = vmatmul.mubr.f32.gmra.mrb[0].mxu0 %v163
    %v236 = vpop.f32.mrb[0].mxu0
    %v237 = vadd.f32 0.0, %v236
    %v238 = vpop.f32.mrb[0].mxu0
    %239 = vdwg.mxu0
    %v242 = vcombine.high %v232, %v232
    %v244 = vunpack.c.l.s4 1983009808
    %v245 = vunpack.c.0.s8 %v244
    %v246 = vlaneseq
    %v247 = vshrl.u32 %v246, 7
    %v248 = vsub.s32 %v245, %v247
    %v249 = vrot.slane %v232, %v248
    %v251 = vunpack.c.l.s4 1983009808
    %v252 = vunpack.c.0.s8 %v251
    %v253 = vlaneseq
    %v254 = vshrl.u32 %v253, 7
    %v255 = vsub.s32 %v252, %v254
    %v256 = vrot.slane %v242, %v255
    %v257 = vcombine.high %v249, %v249
    %v258 = vcombine.high %v256, %v256
    %v259 = vcombine.high %v237, %v237
    %v261 = vunpack.c.l.s4 1983009808
    %v262 = vunpack.c.0.s8 %v261
    %v263 = vlaneseq
    %v264 = vshrl.u32 %v263, 7
    %v265 = vsub.s32 %v262, %v264
    %v266 = vrot.slane %v237, %v265
    %v268 = vunpack.c.l.s4 1983009808
    %v269 = vunpack.c.0.s8 %v268
    %v270 = vlaneseq
    %v271 = vshrl.u32 %v270, 7
    %v272 = vsub.s32 %v269, %v271
    %v273 = vrot.slane %v259, %v272
    %v274 = vcombine.high %v266, %v266
    %v275 = vcombine.high %v273, %v273
    %vm284 = vcmask 25600
    %v285 = vsel %vm284, %v249, -inf
    %v286 = vsel %vm284, %v257, -inf
    %v287 = vsel %vm284, %v256, -inf
    %v288 = vsel %vm284, %v258, -inf
    %v289 = vsel %vm284, %v266, -inf
    %v290 = vmax.f32 %v285, %v289
    %v291 = vsel %vm284, %v274, -inf
    %v292 = vmax.f32 %v286, %v291
    %v293 = vsel %vm284, %v273, -inf
    %v294 = vmax.f32 %v287, %v293
    %v295 = vsel %vm284, %v275, -inf
    %v296 = vmax.f32 %v288, %v295
    %v297 = vmax.f32 %v290, %v292
    %v298 = vmax.f32 %v294, %v296
    %v299 = vmax.f32 %v297, %v298
    %v300 = vsub.f32 %v249, %v299
    %v301 = vsub.f32 %v257, %v299
    %v302 = vsub.f32 %v256, %v299
    %v303 = vsub.f32 %v258, %v299
    %v304 = vsub.f32 %v266, %v299
    %v305 = vsub.f32 %v274, %v299
    %v306 = vsub.f32 %v273, %v299
    %v307 = vsub.f32 %v275, %v299
    %v308 = vmul.f32 %v300, 1.442695
    %v309 = vpow.pop %v308
    %v310 = vmul.f32 %v301, 1.442695
    %v311 = vpow.pop %v310
    %v312 = vmul.f32 %v302, 1.442695
    %v313 = vpow.pop %v312
    %v314 = vmul.f32 %v303, 1.442695
    %v315 = vpow.pop %v314
    %v316 = vmul.f32 %v304, 1.442695
    %v317 = vpow.pop %v316
    %v318 = vmul.f32 %v305, 1.442695
    %v319 = vpow.pop %v318
    %v320 = vmul.f32 %v306, 1.442695
    %v321 = vpow.pop %v320
    %v322 = vmul.f32 %v307, 1.442695
    %v323 = vpow.pop %v322
    %v324 = vsel %vm284, %v309, 0.0
    %v325 = vsel %vm284, %v311, 0.0
    %v326 = vadd.f32 %v324, %v325
    %v327 = vsel %vm284, %v313, 0.0
    %v328 = vadd.f32 %v326, %v327
    %v329 = vsel %vm284, %v315, 0.0
    %v330 = vadd.f32 %v328, %v329
    %v331 = vsel %vm284, %v317, 0.0
    %v332 = vadd.f32 %v330, %v331
    %v333 = vsel %vm284, %v319, 0.0
    %v334 = vadd.f32 %v332, %v333
    %v335 = vsel %vm284, %v321, 0.0
    %v336 = vadd.f32 %v334, %v335
    %v337 = vsel %vm284, %v323, 0.0
    %v338 = vadd.f32 %v336, %v337
    %v339 = vrcp.pop %v338
    %v340 = vmul.f32 %v309, %v339
    %v341 = vmul.f32 %v311, %v339
    %v342 = vmul.f32 %v313, %v339
    %v343 = vmul.f32 %v315, %v339
    %v344 = vmul.f32 %v317, %v339
    %v345 = vmul.f32 %v319, %v339
    %v346 = vmul.f32 %v321, %v339
    %v347 = vmul.f32 %v323, %v339
    %348 = vst.msk [vmem:[%s5] sm:$0x3] %vm284, %v340
    %349 = vst.msk [vmem:[%s5 + $0x2] sm:$0x3] %vm284, %v341
    %350 = vst.msk [vmem:[%s5 + $0x4] sm:$0x3] %vm284, %v342
    %351 = vst.msk [vmem:[%s5 + $0x6] sm:$0x3] %vm284, %v343
    %352 = vst.msk [vmem:[%s5 + $0x8] sm:$0x3] %vm284, %v344
    %353 = vst.msk [vmem:[%s5 + $0xa] sm:$0x3] %vm284, %v345
    %354 = vst.msk [vmem:[%s5 + $0xc] sm:$0x3] %vm284, %v346
    %355 = vst.msk [vmem:[%s5 + $0xe] sm:$0x3] %vm284, %v347
    %357 = vset.pattern.permute.xlu0 0
    %358 = vperm.xlu0 %357, %v340
    %v359 = vpop.permute.xlu0 %358
    %v362 = vunpack.c.l.s4 269488144
    %v363 = vunpack.c.0.s8 %v362
    %v364 = vlaneseq
    %v365 = vshrl.u32 %v364, 7
    %v366 = vsub.s32 %v363, %v365
    %v367 = vrot.slane %v359, %v366
    %369 = vset.pattern.permute.xlu0 0
    %370 = vperm.xlu0 %369, %v341
    %v371 = vpop.permute.xlu0 %370
    %v374 = vunpack.c.l.s4 269488144
    %v375 = vunpack.c.0.s8 %v374
    %v376 = vlaneseq
    %v377 = vshrl.u32 %v376, 7
    %v378 = vsub.s32 %v375, %v377
    %v379 = vrot.slane %v371, %v378
    %381 = vset.pattern.permute.xlu0 0
    %382 = vperm.xlu0 %381, %v342
    %v383 = vpop.permute.xlu0 %382
    %v386 = vunpack.c.l.s4 269488144
    %v387 = vunpack.c.0.s8 %v386
    %v388 = vlaneseq
    %v389 = vshrl.u32 %v388, 7
    %v390 = vsub.s32 %v387, %v389
    %v391 = vrot.slane %v383, %v390
    %393 = vset.pattern.permute.xlu0 0
    %394 = vperm.xlu0 %393, %v343
    %v395 = vpop.permute.xlu0 %394
    %v398 = vunpack.c.l.s4 269488144
    %v399 = vunpack.c.0.s8 %v398
    %v400 = vlaneseq
    %v401 = vshrl.u32 %v400, 7
    %v402 = vsub.s32 %v399, %v401
    %v403 = vrot.slane %v395, %v402
    %405 = vset.pattern.permute.xlu0 0
    %406 = vperm.xlu0 %405, %v344
    %v407 = vpop.permute.xlu0 %406
    %v410 = vunpack.c.l.s4 269488144
    %v411 = vunpack.c.0.s8 %v410
    %v412 = vlaneseq
    %v413 = vshrl.u32 %v412, 7
    %v414 = vsub.s32 %v411, %v413
    %v415 = vrot.slane %v407, %v414
    %417 = vset.pattern.permute.xlu0 0
    %418 = vperm.xlu0 %417, %v345
    %v419 = vpop.permute.xlu0 %418
    %v422 = vunpack.c.l.s4 269488144
    %v423 = vunpack.c.0.s8 %v422
    %v424 = vlaneseq
    %v425 = vshrl.u32 %v424, 7
    %v426 = vsub.s32 %v423, %v425
    %v427 = vrot.slane %v419, %v426
    %429 = vset.pattern.permute.xlu0 0
    %430 = vperm.xlu0 %429, %v346
    %v431 = vpop.permute.xlu0 %430
    %v434 = vunpack.c.l.s4 269488144
    %v435 = vunpack.c.0.s8 %v434
    %v436 = vlaneseq
    %v437 = vshrl.u32 %v436, 7
    %v438 = vsub.s32 %v435, %v437
    %v439 = vrot.slane %v431, %v438
    %441 = vset.pattern.permute.xlu0 0
    %442 = vperm.xlu0 %441, %v347
    %v443 = vpop.permute.xlu0 %442
    %v446 = vunpack.c.l.s4 269488144
    %v447 = vunpack.c.0.s8 %v446
    %v448 = vlaneseq
    %v449 = vshrl.u32 %v448, 7
    %v450 = vsub.s32 %v447, %v449
    %v451 = vrot.slane %v443, %v450
    %v452 = vmul.f32 %v20, %v367
    %v453 = vmul.f32 %v21, %v379
    %v454 = vmul.f32 %v22, %v391
    %v455 = vmul.f32 %v23, %v403
    %v456 = vmul.f32 %v24, %v415
    %v457 = vmul.f32 %v25, %v427
    %v458 = vmul.f32 %v26, %v439
    %v459 = vmul.f32 %v27, %v451
    %vm460 = vcmask 254976
    %v461 = vsel %vm460, %v452, 0.0
    %v462 = vsel %vm460, %v453, 0.0
    %v463 = vadd.f32 %v461, %v462
    %v464 = vsel %vm460, %v454, 0.0
    %v465 = vadd.f32 %v463, %v464
    %v466 = vsel %vm460, %v455, 0.0
    %v467 = vadd.f32 %v465, %v466
    %v468 = vsel %vm460, %v456, 0.0
    %v469 = vadd.f32 %v467, %v468
    %v470 = vsel %vm460, %v457, 0.0
    %v471 = vadd.f32 %v469, %v470
    %v472 = vsel %vm460, %v458, 0.0
    %v473 = vadd.f32 %v471, %v472
    %v474 = vsel %vm460, %v459, 0.0
    %v475 = vadd.f32 %v473, %v474
    %476 = vset.pattern.permute.xlu0 1
    %477 = vperm.xlu0 %476, %v340
    %v478 = vpop.permute.xlu0 %477
    %v481 = vunpack.c.l.s4 269488144
    %v482 = vunpack.c.0.s8 %v481
    %v483 = vlaneseq
    %v484 = vshrl.u32 %v483, 7
    %v485 = vsub.s32 %v482, %v484
    %v486 = vrot.slane %v478, %v485
    %487 = vset.pattern.permute.xlu0 1
    %488 = vperm.xlu0 %487, %v341
    %v489 = vpop.permute.xlu0 %488
    %v492 = vunpack.c.l.s4 269488144
    %v493 = vunpack.c.0.s8 %v492
    %v494 = vlaneseq
    %v495 = vshrl.u32 %v494, 7
    %v496 = vsub.s32 %v493, %v495
    %v497 = vrot.slane %v489, %v496
    %498 = vset.pattern.permute.xlu0 1
    %499 = vperm.xlu0 %498, %v342
    %v500 = vpop.permute.xlu0 %499
    %v503 = vunpack.c.l.s4 269488144
    %v504 = vunpack.c.0.s8 %v503
    %v505 = vlaneseq
    %v506 = vshrl.u32 %v505, 7
    %v507 = vsub.s32 %v504, %v506
    %v508 = vrot.slane %v500, %v507
    %509 = vset.pattern.permute.xlu0 1
    %510 = vperm.xlu0 %509, %v343
    %v511 = vpop.permute.xlu0 %510
    %v514 = vunpack.c.l.s4 269488144
    %v515 = vunpack.c.0.s8 %v514
    %v516 = vlaneseq
    %v517 = vshrl.u32 %v516, 7
    %v518 = vsub.s32 %v515, %v517
    %v519 = vrot.slane %v511, %v518
    %520 = vset.pattern.permute.xlu0 1
    %521 = vperm.xlu0 %520, %v344
    %v522 = vpop.permute.xlu0 %521
    %v525 = vunpack.c.l.s4 269488144
    %v526 = vunpack.c.0.s8 %v525
    %v527 = vlaneseq
    %v528 = vshrl.u32 %v527, 7
    %v529 = vsub.s32 %v526, %v528
    %v530 = vrot.slane %v522, %v529
    %531 = vset.pattern.permute.xlu0 1
    %532 = vperm.xlu0 %531, %v345
    %v533 = vpop.permute.xlu0 %532
    %v536 = vunpack.c.l.s4 269488144
    %v537 = vunpack.c.0.s8 %v536
    %v538 = vlaneseq
    %v539 = vshrl.u32 %v538, 7
    %v540 = vsub.s32 %v537, %v539
    %v541 = vrot.slane %v533, %v540
    %542 = vset.pattern.permute.xlu0 1
    %543 = vperm.xlu0 %542, %v346
    %v544 = vpop.permute.xlu0 %543
    %v547 = vunpack.c.l.s4 269488144
    %v548 = vunpack.c.0.s8 %v547
    %v549 = vlaneseq
    %v550 = vshrl.u32 %v549, 7
    %v551 = vsub.s32 %v548, %v550
    %v552 = vrot.slane %v544, %v551
    %553 = vset.pattern.permute.xlu0 1
    %554 = vperm.xlu0 %553, %v347
    %v555 = vpop.permute.xlu0 %554
    %v558 = vunpack.c.l.s4 269488144
    %v559 = vunpack.c.0.s8 %v558
    %v560 = vlaneseq
    %v561 = vshrl.u32 %v560, 7
    %v562 = vsub.s32 %v559, %v561
    %v563 = vrot.slane %v555, %v562
    %v564 = vmul.f32 %v20, %v486
    %v565 = vmul.f32 %v21, %v497
    %v566 = vmul.f32 %v22, %v508
    %v567 = vmul.f32 %v23, %v519
    %v568 = vmul.f32 %v24, %v530
    %v569 = vmul.f32 %v25, %v541
    %v570 = vmul.f32 %v26, %v552
    %v571 = vmul.f32 %v27, %v563
    %v572 = vsel %vm460, %v564, 0.0
    %v573 = vsel %vm460, %v565, 0.0
    %v574 = vadd.f32 %v572, %v573
    %v575 = vsel %vm460, %v566, 0.0
    %v576 = vadd.f32 %v574, %v575
    %v577 = vsel %vm460, %v567, 0.0
    %v578 = vadd.f32 %v576, %v577
    %v579 = vsel %vm460, %v568, 0.0
    %v580 = vadd.f32 %v578, %v579
    %v581 = vsel %vm460, %v569, 0.0
    %v582 = vadd.f32 %v580, %v581
    %v583 = vsel %vm460, %v570, 0.0
    %v584 = vadd.f32 %v582, %v583
    %v585 = vsel %vm460, %v571, 0.0
    %v586 = vadd.f32 %v584, %v585
    %587 = vset.pattern.permute.xlu0 2
    %588 = vperm.xlu0 %587, %v340
    %v589 = vpop.permute.xlu0 %588
    %v592 = vunpack.c.l.s4 269488144
    %v593 = vunpack.c.0.s8 %v592
    %v594 = vlaneseq
    %v595 = vshrl.u32 %v594, 7
    %v596 = vsub.s32 %v593, %v595
    %v597 = vrot.slane %v589, %v596
    %598 = vset.pattern.permute.xlu0 2
    %599 = vperm.xlu0 %598, %v341
    %v600 = vpop.permute.xlu0 %599
    %v603 = vunpack.c.l.s4 269488144
    %v604 = vunpack.c.0.s8 %v603
    %v605 = vlaneseq
    %v606 = vshrl.u32 %v605, 7
    %v607 = vsub.s32 %v604, %v606
    %v608 = vrot.slane %v600, %v607
    %609 = vset.pattern.permute.xlu0 2
    %610 = vperm.xlu0 %609, %v342
    %v611 = vpop.permute.xlu0 %610
    %v614 = vunpack.c.l.s4 269488144
    %v615 = vunpack.c.0.s8 %v614
    %v616 = vlaneseq
    %v617 = vshrl.u32 %v616, 7
    %v618 = vsub.s32 %v615, %v617
    %v619 = vrot.slane %v611, %v618
    %620 = vset.pattern.permute.xlu0 2
    %621 = vperm.xlu0 %620, %v343
    %v622 = vpop.permute.xlu0 %621
    %v625 = vunpack.c.l.s4 269488144
    %v626 = vunpack.c.0.s8 %v625
    %v627 = vlaneseq
    %v628 = vshrl.u32 %v627, 7
    %v629 = vsub.s32 %v626, %v628
    %v630 = vrot.slane %v622, %v629
    %631 = vset.pattern.permute.xlu0 2
    %632 = vperm.xlu0 %631, %v344
    %v633 = vpop.permute.xlu0 %632
    %v636 = vunpack.c.l.s4 269488144
    %v637 = vunpack.c.0.s8 %v636
    %v638 = vlaneseq
    %v639 = vshrl.u32 %v638, 7
    %v640 = vsub.s32 %v637, %v639
    %v641 = vrot.slane %v633, %v640
    %642 = vset.pattern.permute.xlu0 2
    %643 = vperm.xlu0 %642, %v345
    %v644 = vpop.permute.xlu0 %643
    %v647 = vunpack.c.l.s4 269488144
    %v648 = vunpack.c.0.s8 %v647
    %v649 = vlaneseq
    %v650 = vshrl.u32 %v649, 7
    %v651 = vsub.s32 %v648, %v650
    %v652 = vrot.slane %v644, %v651
    %653 = vset.pattern.permute.xlu0 2
    %654 = vperm.xlu0 %653, %v346
    %v655 = vpop.permute.xlu0 %654
    %v658 = vunpack.c.l.s4 269488144
    %v659 = vunpack.c.0.s8 %v658
    %v660 = vlaneseq
    %v661 = vshrl.u32 %v660, 7
    %v662 = vsub.s32 %v659, %v661
    %v663 = vrot.slane %v655, %v662
    %664 = vset.pattern.permute.xlu0 2
    %665 = vperm.xlu0 %664, %v347
    %v666 = vpop.permute.xlu0 %665
    %v669 = vunpack.c.l.s4 269488144
    %v670 = vunpack.c.0.s8 %v669
    %v671 = vlaneseq
    %v672 = vshrl.u32 %v671, 7
    %v673 = vsub.s32 %v670, %v672
    %v674 = vrot.slane %v666, %v673
    %v675 = vmul.f32 %v20, %v597
    %v676 = vmul.f32 %v21, %v608
    %v677 = vmul.f32 %v22, %v619
    %v678 = vmul.f32 %v23, %v630
    %v679 = vmul.f32 %v24, %v641
    %v680 = vmul.f32 %v25, %v652
    %v681 = vmul.f32 %v26, %v663
    %v682 = vmul.f32 %v27, %v674
    %v683 = vsel %vm460, %v675, 0.0
    %v684 = vsel %vm460, %v676, 0.0
    %v685 = vadd.f32 %v683, %v684
    %v686 = vsel %vm460, %v677, 0.0
    %v687 = vadd.f32 %v685, %v686
    %v688 = vsel %vm460, %v678, 0.0
    %v689 = vadd.f32 %v687, %v688
    %v690 = vsel %vm460, %v679, 0.0
    %v691 = vadd.f32 %v689, %v690
    %v692 = vsel %vm460, %v680, 0.0
    %v693 = vadd.f32 %v691, %v692
    %v694 = vsel %vm460, %v681, 0.0
    %v695 = vadd.f32 %v693, %v694
    %v696 = vsel %vm460, %v682, 0.0
    %v697 = vadd.f32 %v695, %v696
    %698 = vset.pattern.permute.xlu0 3
    %699 = vperm.xlu0 %698, %v340
    %v700 = vpop.permute.xlu0 %699
    %v703 = vunpack.c.l.s4 269488144
    %v704 = vunpack.c.0.s8 %v703
    %v705 = vlaneseq
    %v706 = vshrl.u32 %v705, 7
    %v707 = vsub.s32 %v704, %v706
    %v708 = vrot.slane %v700, %v707
    %709 = vset.pattern.permute.xlu0 3
    %710 = vperm.xlu0 %709, %v341
    %v711 = vpop.permute.xlu0 %710
    %v714 = vunpack.c.l.s4 269488144
    %v715 = vunpack.c.0.s8 %v714
    %v716 = vlaneseq
    %v717 = vshrl.u32 %v716, 7
    %v718 = vsub.s32 %v715, %v717
    %v719 = vrot.slane %v711, %v718
    %720 = vset.pattern.permute.xlu0 3
    %721 = vperm.xlu0 %720, %v342
    %v722 = vpop.permute.xlu0 %721
    %v725 = vunpack.c.l.s4 269488144
    %v726 = vunpack.c.0.s8 %v725
    %v727 = vlaneseq
    %v728 = vshrl.u32 %v727, 7
    %v729 = vsub.s32 %v726, %v728
    %v730 = vrot.slane %v722, %v729
    %731 = vset.pattern.permute.xlu0 3
    %732 = vperm.xlu0 %731, %v343
    %v733 = vpop.permute.xlu0 %732
    %v736 = vunpack.c.l.s4 269488144
    %v737 = vunpack.c.0.s8 %v736
    %v738 = vlaneseq
    %v739 = vshrl.u32 %v738, 7
    %v740 = vsub.s32 %v737, %v739
    %v741 = vrot.slane %v733, %v740
    %742 = vset.pattern.permute.xlu0 3
    %743 = vperm.xlu0 %742, %v344
    %v744 = vpop.permute.xlu0 %743
    %v747 = vunpack.c.l.s4 269488144
    %v748 = vunpack.c.0.s8 %v747
    %v749 = vlaneseq
    %v750 = vshrl.u32 %v749, 7
    %v751 = vsub.s32 %v748, %v750
    %v752 = vrot.slane %v744, %v751
    %753 = vset.pattern.permute.xlu0 3
    %754 = vperm.xlu0 %753, %v345
    %v755 = vpop.permute.xlu0 %754
    %v758 = vunpack.c.l.s4 269488144
    %v759 = vunpack.c.0.s8 %v758
    %v760 = vlaneseq
    %v761 = vshrl.u32 %v760, 7
    %v762 = vsub.s32 %v759, %v761
    %v763 = vrot.slane %v755, %v762
    %764 = vset.pattern.permute.xlu0 3
    %765 = vperm.xlu0 %764, %v346
    %v766 = vpop.permute.xlu0 %765
    %v769 = vunpack.c.l.s4 269488144
    %v770 = vunpack.c.0.s8 %v769
    %v771 = vlaneseq
    %v772 = vshrl.u32 %v771, 7
    %v773 = vsub.s32 %v770, %v772
    %v774 = vrot.slane %v766, %v773
    %775 = vset.pattern.permute.xlu0 3
    %776 = vperm.xlu0 %775, %v347
    %v777 = vpop.permute.xlu0 %776
    %v780 = vunpack.c.l.s4 269488144
    %v781 = vunpack.c.0.s8 %v780
    %v782 = vlaneseq
    %v783 = vshrl.u32 %v782, 7
    %v784 = vsub.s32 %v781, %v783
    %v785 = vrot.slane %v777, %v784
    %v786 = vmul.f32 %v20, %v708
    %v787 = vmul.f32 %v21, %v719
    %v788 = vmul.f32 %v22, %v730
    %v789 = vmul.f32 %v23, %v741
    %v790 = vmul.f32 %v24, %v752
    %v791 = vmul.f32 %v25, %v763
    %v792 = vmul.f32 %v26, %v774
    %v793 = vmul.f32 %v27, %v785
    %v794 = vsel %vm460, %v786, 0.0
    %v795 = vsel %vm460, %v787, 0.0
    %v796 = vadd.f32 %v794, %v795
    %v797 = vsel %vm460, %v788, 0.0
    %v798 = vadd.f32 %v796, %v797
    %v799 = vsel %vm460, %v789, 0.0
    %v800 = vadd.f32 %v798, %v799
    %v801 = vsel %vm460, %v790, 0.0
    %v802 = vadd.f32 %v800, %v801
    %v803 = vsel %vm460, %v791, 0.0
    %v804 = vadd.f32 %v802, %v803
    %v805 = vsel %vm460, %v792, 0.0
    %v806 = vadd.f32 %v804, %v805
    %v807 = vsel %vm460, %v793, 0.0
    %v808 = vadd.f32 %v806, %v807
    %810 = vrot.lane.b32.xlu0 %v586, 32
    %v811 = vpop.permute.xlu0 %810
    %814 = vrot.lane.b32.xlu0 %v697, 64
    %v815 = vpop.permute.xlu0 %814
    %818 = vrot.lane.b32.xlu0 %v808, 96
    %v819 = vpop.permute.xlu0 %818
    %v821 = vsel %vm74, %v475, %v811
    %vm822 = vcmask 523264
    %v823 = vsel %vm822, %v821, %v815
    %vm824 = vcmask 785408
    %v825 = vsel %vm824, %v823, %v819
    %v826 = vld [vmem:[%s3] sm:$0xff]
    %v827 = vld [vmem:[%s3 + $0x8] sm:$0xff]
    %v828 = vld [vmem:[%s3 + $0x10] sm:$0xff]
    %v829 = vld [vmem:[%s3 + $0x18] sm:$0xff]
    %v830 = vld [vmem:[%s3 + $0x20] sm:$0xff]
    %v831 = vld [vmem:[%s3 + $0x28] sm:$0xff]
    %v832 = vld [vmem:[%s3 + $0x30] sm:$0xff]
    %v833 = vld [vmem:[%s3 + $0x38] sm:$0xff]
    %v834 = vld [vmem:[%s3 + $0x40] sm:$0xff]
    %v835 = vld [vmem:[%s3 + $0x48] sm:$0xff]
    %v836 = vld [vmem:[%s3 + $0x50] sm:$0xff]
    %v837 = vld [vmem:[%s3 + $0x58] sm:$0xff]
    %v838 = vld [vmem:[%s3 + $0x60] sm:$0xff]
    %v839 = vld [vmem:[%s3 + $0x68] sm:$0xff]
    %v840 = vld [vmem:[%s3 + $0x70] sm:$0xff]
    %v841 = vld [vmem:[%s3 + $0x78] sm:$0xff]
    %842 = vmatprep.subr.mxu0 0.0
    %843 = vmatpush1.msra.mxu0 %v826
    %844 = vmatprep.subr.mxu0 0.0
    %845 = vmatpush1.msra.mxu0 %v827
    %846 = vmatprep.subr.mxu0 0.0
    %847 = vmatpush1.msra.mxu0 %v828
    %848 = vmatprep.subr.mxu0 0.0
    %849 = vmatpush1.msra.mxu0 %v829
    %850 = vmatprep.subr.mxu0 0.0
    %851 = vmatpush1.msra.mxu0 %v830
    %852 = vmatprep.subr.mxu0 0.0
    %853 = vmatpush1.msra.mxu0 %v831
    %854 = vmatprep.subr.mxu0 0.0
    %855 = vmatpush1.msra.mxu0 %v832
    %856 = vmatprep.subr.mxu0 0.0
    %857 = vmatpush1.msra.mxu0 %v833
    %858 = vmatprep.subr.mxu0 0.0
    %859 = vmatpush1.msra.mxu0 %v834
    %860 = vmatprep.subr.mxu0 0.0
    %861 = vmatpush1.msra.mxu0 %v835
    %862 = vmatprep.subr.mxu0 0.0
    %863 = vmatpush1.msra.mxu0 %v836
    %864 = vmatprep.subr.mxu0 0.0
    %865 = vmatpush1.msra.mxu0 %v837
    %866 = vmatprep.subr.mxu0 0.0
    %867 = vmatpush1.msra.mxu0 %v838
    %868 = vmatprep.subr.mxu0 0.0
    %869 = vmatpush1.msra.mxu0 %v839
    %870 = vmatprep.subr.mxu0 0.0
    %871 = vmatpush1.msra.mxu0 %v840
    %872 = vmatprep.subr.mxu0 0.0
    %873 = vmatpush1.msra.mxu0 %v841
    %874 = vmatprep.subr.mxu0 0.0
    %875 = vmatpush1.msra.mxu0 0.0
    %876 = vmatprep.subr.mxu0 0.0
    %877 = vmatpush1.msra.mxu0 0.0
    %878 = vmatprep.subr.mxu0 0.0
    %879 = vmatpush1.msra.mxu0 0.0
    %880 = vmatprep.subr.mxu0 0.0
    %881 = vmatpush1.msra.mxu0 0.0
    %882 = vmatprep.subr.mxu0 0.0
    %883 = vmatpush1.msra.mxu0 0.0
    %884 = vmatprep.subr.mxu0 0.0
    %885 = vmatpush1.msra.mxu0 0.0
    %886 = vmatprep.subr.mxu0 0.0
    %887 = vmatpush1.msra.mxu0 0.0
    %888 = vmatprep.subr.mxu0 0.0
    %889 = vmatpush1.msra.mxu0 0.0
    %890 = vmatprep.subr.mxu0 0.0
    %891 = vmatpush1.msra.mxu0 0.0
    %892 = vmatprep.subr.mxu0 0.0
    %893 = vmatpush1.msra.mxu0 0.0
    %894 = vmatprep.subr.mxu0 0.0
    %895 = vmatpush1.msra.mxu0 0.0
    %896 = vmatprep.subr.mxu0 0.0
    %897 = vmatpush1.msra.mxu0 0.0
    %898 = vmatprep.subr.mxu0 0.0
    %899 = vmatpush1.msra.mxu0 0.0
    %900 = vmatprep.subr.mxu0 0.0
    %901 = vmatpush1.msra.mxu0 0.0
    %902 = vmatprep.subr.mxu0 0.0
    %903 = vmatpush1.msra.mxu0 0.0
    %904 = vmatprep.subr.mxu0 0.0
    %905 = vmatpush1.msra.mxu0 0.0
    %906 = vmatprep.mubr.f32.mxu0 0.0
    %907 = vmatmul.mubr.f32.gmra.mrb[0].mxu0 %v825
    %v908 = vpop.f32.mrb[0].mxu0
    %v909 = vadd.f32 0.0, %v908
    %v910 = vpop.f32.mrb[0].mxu0
    %911 = vdwg.mxu0
    %912 = vst.msk [vmem:[#allocation2] sm:$0x3] %vm460, %v909
    // Predicated region
    $region18: #{tpu_custom_call.1} parent=1 // pred_check
      _
    $region19: #{tpu_custom_call.1} parent=1 // pred_check_branch
      %914 = sbr.rel (0) target = $region21
    $region20: #{tpu_custom_call.1} parent=1 // pred_region
      %s916 = ssub.s32 32, 32
      %917 = vsyncadd [#allocation3], %s916
      %s919 = sshll.u32 [#allocation2], 4
      %s920 = int_to_ptr.vmem [resolvable:$true] %s919
      %922 = dma.vmem_to_hbm [thread:$0]  %s920, 32, %s4, [#allocation3]
    $region21: #{tpu_custom_call.1} parent=1 // pred_fallthru
      _
    // Predicated region
    $region22: #{tpu_custom_call.1} parent=1 // pred_check
      _
    $region23: #{tpu_custom_call.1} parent=1 // pred_check_branch
      %924 = sbr.rel (0) target = $region25
    $region24: #{tpu_custom_call.1} parent=1 // pred_region
      _
    $region25: #{tpu_custom_call.1} parent=1 // pred_fallthru
      _
    // Predicated region
    $region26: #{tpu_custom_call.1} parent=1 // pred_check
      _
    $region27: #{tpu_custom_call.1} parent=1 // pred_check_branch
      %926 = sbr.rel (0) target = $region29
    $region28: #{tpu_custom_call.1} parent=1 // pred_region
      %927 = dma.done [#allocation3], 32
    $region29: #{tpu_custom_call.1} parent=1 // pred_fallthru
      _
    // Predicated region
    $region30: #{tpu_custom_call.1} parent=1 // pred_check
      _
    $region31: #{tpu_custom_call.1} parent=1 // pred_check_branch
      %929 = sbr.rel (0) target = $region33
    $region32: #{tpu_custom_call.1} parent=1 // pred_region
      _
    $region33: #{tpu_custom_call.1} parent=1 // pred_fallthru
      _
    %930 = vsyncpa [#allocation3], 1

</llo_original>
